<compile_context>
chip_gen: v7x
topology: tpu7x:2x2x1
jax: 0.10.0
libtpu: 0.0.40
codegen_flags: <defaults>
</compile_context>

<pallas_src>
import functools

import jax
import jax.numpy as jnp
from jax.experimental import pallas as pl
from jax.experimental.pallas import tpu as pltpu

LANES = 128            # vreg lane width
SUBLANES = 8           # vreg sublane count (f32 tile second-minor)
NUM_SPLITS = 2         # "parallel" shards of the row-block axis (both TCs on v7x)
ROW_BLOCK_MAX = 8192   # (8192, 128) f32 = 4 MiB per input block


def _pow_gamma(d, gamma):
    """d ** gamma; non-negative integer gammas become VPU multiplies."""
    g = float(gamma)
    if g == float(int(g)) and 0 <= int(g) <= 32:
        gi = int(g)
        if gi == 0:
            return jnp.ones_like(d)
        result = None
        base = d
        while gi:                       # exponentiation by squaring
            if gi & 1:
                result = base if result is None else result * base
            gi >>= 1
            if gi:
                base = base * base
        return result
    # Non-integer gamma: matches torch pow semantics (NaN for negative base).
    return d ** gamma


def _focal_inner(s, y, alpha, gamma):
    """Elementwise +w*(y*log s + (1-y)*log(1-s)); the NEGATIVE of the loss term.

    Shared by the kernel and the plain-JAX remainder path; the single negation
    happens once in the wrapper instead of per element.
    """
    s = s.astype(jnp.float32)
    y = y.astype(jnp.float32)
    w = _pow_gamma(s - y, gamma)
    if alpha > 0:
        # alpha*y + (1-alpha)*(1-y)  ==  (1-alpha) + (2*alpha-1)*y
        w = w * ((2.0 * alpha - 1.0) * y + (1.0 - alpha))
    log_s = jnp.maximum(jnp.log(s), -100.0)        # PyTorch BCE log clamp
    log_1ms = jnp.maximum(jnp.log(1.0 - s), -100.0)
    # y*log_s + (1-y)*log_1ms  ==  log_1ms + y*(log_s - log_1ms)
    return w * (log_1ms + y * (log_s - log_1ms))


def _focal_loss_kernel(score_ref, label_ref, out_ref, *, alpha, gamma):
    j = pl.program_id(1)

    @pl.when(j == 0)
    def _():
        out_ref[...] = jnp.zeros_like(out_ref)

    contrib = _focal_inner(score_ref[...], label_ref[...], alpha, gamma)
    # Lane-parallel partial sums into the resident output block; the final
    # cross-lane reduce (and negation) happens once in the wrapper.
    out_ref[...] += jnp.sum(contrib, axis=0, keepdims=True)


def focal_loss(score, label, alpha=0.25, gamma=2.0):
    """Pallas TPU implementation of PP-YOLOE FocalLoss.forward (reduction='sum')."""
    assert score.shape == label.shape
    alpha = float(alpha)
    gamma = float(gamma)
    n = score.size

    s_flat = jnp.ravel(score)
    y_flat = jnp.ravel(label)

    neg_total = jnp.float32(0.0)

    rows = n // LANES
    if rows == 0:                                  # < 128 elements: plain JAX
        neg_total = jnp.sum(_focal_inner(s_flat, y_flat, alpha, gamma))
        return -neg_total

    # ---- block / split selection (kernel only ever sees complete blocks) ----
    if rows < 2 * SUBLANES:
        # Too small to 2-way split: single block equal to the full array dims.
        splits, row_block, bps = 1, rows, 1
    else:
        splits = NUM_SPLITS
        per_split = rows // splits
        align = 32 if per_split >= 32 else SUBLANES   # bf16-friendly when big
        row_block = min(ROW_BLOCK_MAX, (per_split // align) * align)
        bps = rows // (splits * row_block)            # blocks per split (>= 1)
    covered_rows = splits * bps * row_block
    covered = covered_rows * LANES

    # Leftover rows (< splits*row_block) plus any ragged (<128) tail: plain JAX.
    # Only this small slab is ever sliced (copied) out of HBM.
    if covered < n:
        neg_total = neg_total + jnp.sum(
            _focal_inner(s_flat[covered:], y_flat[covered:], alpha, gamma))

    # 2-D (rows, 128) view of the input; free reshape when n is 128-aligned.
    if rows * LANES == n:
        s2 = s_flat.reshape(rows, LANES)
        y2 = y_flat.reshape(rows, LANES)
    else:
        # TODO(synk): non-128-aligned sizes pay one slice copy here.
        s2 = s_flat[: rows * LANES].reshape(rows, LANES)
        y2 = y_flat[: rows * LANES].reshape(rows, LANES)

    kernel = functools.partial(_focal_loss_kernel, alpha=alpha, gamma=gamma)

    itemsize = jnp.dtype(score.dtype).itemsize
    block_bytes = row_block * LANES * itemsize
    cost = pl.CostEstimate(
        flops=12 * covered,
        transcendentals=2 * covered,
        bytes_accessed=2 * covered * itemsize + splits * LANES * 4,
    )

    in_map = lambda c, j: (c * bps + j, 0)
    partials = pl.pallas_call(
        kernel,
        out_shape=jax.ShapeDtypeStruct((splits, 1, LANES), jnp.float32),
        grid=(splits, bps),
        in_specs=[
            pl.BlockSpec((row_block, LANES), in_map),
            pl.BlockSpec((row_block, LANES), in_map),
        ],
        out_specs=pl.BlockSpec((None, 1, LANES), lambda c, j: (c, 0, 0)),
        compiler_params=pltpu.CompilerParams(
            # On v7x, pltpu.CORE_PARALLEL on the leading axis would force the
            # 2-TensorCore split; "parallel" is kept as it is safe on 1-TC chips.
            dimension_semantics=("parallel", "arbitrary"),
            # 2 inputs x 2 pipeline buffers x block + headroom (<= ~20 MiB f32).
            vmem_limit_bytes=int(max(4 * block_bytes + (4 << 20), 16 << 20)),
        ),
        cost_estimate=cost,
    )(s2, y2)

    neg_total = neg_total + jnp.sum(partials)
    return -neg_total


def focal_loss_ref(score, label, alpha=0.25, gamma=2.0):
    """Pure-JAX reference matching the PyTorch module."""
    score = score.astype(jnp.float32)
    label = label.astype(jnp.float32)
    w = (score - label) ** gamma
    if alpha > 0:
        w = w * (alpha * label + (1.0 - alpha) * (1.0 - label))
    log_s = jnp.maximum(jnp.log(score), -100.0)
    log_1ms = jnp.maximum(jnp.log(1.0 - score), -100.0)
    return jnp.sum(w * -(label * log_s + (1.0 - label) * log_1ms))


if __name__ == "__main__":
    key = jax.random.PRNGKey(0)

    def make_inputs(shape, k):
        k1, k2 = jax.random.split(k)
        score = jax.nn.sigmoid(jax.random.normal(k1, shape, dtype=jnp.float32))
        label = (jax.random.uniform(k2, shape) > 0.8).astype(jnp.float32)
        return score, label

    k0, k1, k2 = jax.random.split(key, 3)

    # Primary example: small NCHW detection-head style tensors (fully covered).
    score, label = make_inputs((2, 4, 16, 16), k0)
    loss = jax.block_until_ready(focal_loss(score, label, alpha=0.25, gamma=2.0))
    ref = focal_loss_ref(score, label, alpha=0.25, gamma=2.0)
    assert jnp.allclose(loss, ref, rtol=1e-4, atol=1e-4), (loss, ref)

    # Exercises the remainder-rows (plain-JAX leftover slab) path.
    score, label = make_inputs((1, 8, 257, 256), k1)
    loss = jax.block_until_ready(focal_loss(score, label))
    ref = focal_loss_ref(score, label)
    assert jnp.allclose(loss, ref, rtol=1e-4, atol=1e-4), (loss, ref)

    # Exercises the non-128-aligned (ragged tail) path.
    score, label = make_inputs((3, 5, 7, 11), k2)
    loss = jax.block_until_ready(focal_loss(score, label))
    ref = focal_loss_ref(score, label)
    assert jnp.allclose(loss, ref, rtol=1e-4, atol=1e-4), (loss, ref)

    print("KERNEL_OK")
</pallas_src>

<mosaic_0001>
module attributes {stable_mosaic.version = 11 : i64} {
  func.func @_focal_loss_kernel(%arg0: i32, %arg1: i32, %arg2: memref<8x128xf32, #tpu.memory_space<vmem>>, %arg3: memref<8x128xf32, #tpu.memory_space<vmem>>, %arg4: memref<1x1x128xf32, #tpu.memory_space<vmem>>) attributes {dimension_semantics = [#tpu.dimension_semantics<parallel>, #tpu.dimension_semantics<arbitrary>], iteration_bounds = array<i64: 2, 1>, scalar_prefetch = 0 : i64, scratch_operands = 0 : i64, tpu.core_type = #tpu.core_type<tc>, window_params = [{transform_indices = @transform_0, window_bounds = array<i64: 8, 128>}, {transform_indices = @transform_1, window_bounds = array<i64: 8, 128>}, {transform_indices = @transform_2, window_bounds = array<i64: 1, 1, 128>}]} {
    %c0_i32 = arith.constant 0 : i32
    %0 = arith.cmpi eq, %arg1, %c0_i32 : i32
    %1 = arith.extui %0 : i1 to i32
    %c0_i32_0 = arith.constant 0 : i32
    %2 = arith.cmpi ne, %1, %c0_i32_0 : i32
    scf.if %2 {
      %cst_15 = arith.constant 0.000000e+00 : f32
      %32 = vector.broadcast %cst_15 : f32 to vector<1x128xf32>
      %c0_16 = arith.constant 0 : index
      %c0_17 = arith.constant 0 : index
      %c0_18 = arith.constant 0 : index
      %33 = vector.load %arg4[%c0_16, %c0_17, %c0_18] : memref<1x1x128xf32, #tpu.memory_space<vmem>>, vector<1x1x128xf32>
      %34 = vector.shape_cast %33 : vector<1x1x128xf32> to vector<1x128xf32>
      %35 = vector.shape_cast %32 : vector<1x128xf32> to vector<1x1x128xf32>
      tpu.vector_store %arg4[%c0_16, %c0_17, %c0_18], %35 {strides = array<i32>} : memref<1x1x128xf32, #tpu.memory_space<vmem>>, vector<1x1x128xf32>,
    } else {
    }
    %c0 = arith.constant 0 : index
    %c0_1 = arith.constant 0 : index
    %3 = vector.load %arg2[%c0, %c0_1] : memref<8x128xf32, #tpu.memory_space<vmem>>, vector<8x128xf32>
    %c0_2 = arith.constant 0 : index
    %c0_3 = arith.constant 0 : index
    %4 = vector.load %arg3[%c0_2, %c0_3] : memref<8x128xf32, #tpu.memory_space<vmem>>, vector<8x128xf32>
    %5 = arith.subf %3, %4 : vector<8x128xf32>
    %6 = arith.mulf %5, %5 : vector<8x128xf32>
    %cst = arith.constant -5.000000e-01 : f32
    %7 = vector.broadcast %cst : f32 to vector<8x128xf32>
    %8 = arith.mulf %7, %4 : vector<8x128xf32>
    %cst_4 = arith.constant 7.500000e-01 : f32
    %9 = vector.broadcast %cst_4 : f32 to vector<8x128xf32>
    %10 = arith.addf %8, %9 : vector<8x128xf32>
    %11 = arith.mulf %6, %10 : vector<8x128xf32>
    %12 = math.log %3 : vector<8x128xf32>
    %cst_5 = arith.constant -1.000000e+02 : f32
    %13 = vector.broadcast %cst_5 : f32 to vector<8x128xf32>
    %14 = arith.maximumf %12, %13 : vector<8x128xf32>
    %cst_6 = arith.constant 1.000000e+00 : f32
    %15 = vector.broadcast %cst_6 : f32 to vector<8x128xf32>
    %16 = arith.subf %15, %3 : vector<8x128xf32>
    %17 = math.log %16 : vector<8x128xf32>
    %cst_7 = arith.constant -1.000000e+02 : f32
    %18 = vector.broadcast %cst_7 : f32 to vector<8x128xf32>
    %19 = arith.maximumf %17, %18 : vector<8x128xf32>
    %20 = arith.subf %14, %19 : vector<8x128xf32>
    %21 = arith.mulf %4, %20 : vector<8x128xf32>
    %22 = arith.addf %19, %21 : vector<8x128xf32>
    %23 = arith.mulf %11, %22 : vector<8x128xf32>
    %c0_8 = arith.constant 0 : index
    %c0_9 = arith.constant 0 : index
    %c0_10 = arith.constant 0 : index
    %24 = vector.load %arg4[%c0_8, %c0_9, %c0_10] : memref<1x1x128xf32, #tpu.memory_space<vmem>>, vector<1x1x128xf32>
    %25 = vector.shape_cast %24 : vector<1x1x128xf32> to vector<1x128xf32>
    %cst_11 = arith.constant dense<0.000000e+00> : vector<128xf32>
    %26 = vector.multi_reduction <add>, %23, %cst_11 [0] : vector<8x128xf32> to vector<128xf32>
    %27 = vector.shape_cast %26 : vector<128xf32> to vector<1x128xf32>
    %28 = arith.addf %25, %27 : vector<1x128xf32>
    %c0_12 = arith.constant 0 : index
    %c0_13 = arith.constant 0 : index
    %c0_14 = arith.constant 0 : index
    %29 = vector.load %arg4[%c0_12, %c0_13, %c0_14] : memref<1x1x128xf32, #tpu.memory_space<vmem>>, vector<1x1x128xf32>
    %30 = vector.shape_cast %29 : vector<1x1x128xf32> to vector<1x128xf32>
    %31 = vector.shape_cast %28 : vector<1x128xf32> to vector<1x1x128xf32>
    tpu.vector_store %arg4[%c0_12, %c0_13, %c0_14], %31 {strides = array<i32>} : memref<1x1x128xf32, #tpu.memory_space<vmem>>, vector<1x1x128xf32>,
    return
  }
  func.func @transform_0(%arg0: i32, %arg1: i32) -> (i32, i32) {
    %c1_i32 = arith.constant 1 : i32
    %0 = arith.muli %arg0, %c1_i32 : i32
    %1 = arith.addi %0, %arg1 : i32
    %c0_i32 = arith.constant 0 : i32
    %c0_i32_0 = arith.constant 0 : i32
    return %1, %c0_i32 : i32, i32
  }
  func.func @transform_1(%arg0: i32, %arg1: i32) -> (i32, i32) {
    %c1_i32 = arith.constant 1 : i32
    %0 = arith.muli %arg0, %c1_i32 : i32
    %1 = arith.addi %0, %arg1 : i32
    %c0_i32 = arith.constant 0 : i32
    %c0_i32_0 = arith.constant 0 : i32
    return %1, %c0_i32 : i32, i32
  }
  func.func @transform_2(%arg0: i32, %arg1: i32) -> (i32, i32, i32) {
    %c0_i32 = arith.constant 0 : i32
    %c0_i32_0 = arith.constant 0 : i32
    %c0_i32_1 = arith.constant 0 : i32
    return %arg0, %c0_i32, %c0_i32_0 : i32, i32, i32
  }
}

</mosaic_0001>

<llo_original>
// kernel: tpu_custom_call.1
$region0: #{tpu_custom_call.1}
  #allocation0 [shape = 'u32[]', space=smem, size = 0x4, offset = 0x4, fixed_abs, tag = 'smem constant byte address 0x4 - core index']
  #allocation1 [shape = 'u32[144,128]{1,0:T(1,128)}', space=vmem, size = 0x12000, scoped, tag = 'internal scratch']
  %s0 = inlined_call_operand.hbm [shape: f32[16,128], index: 0, kind: input, shape index: {}]
  %s1 = inlined_call_operand.hbm [shape: f32[16,128], index: 1, kind: input, shape index: {}]
  %s2 = inlined_call_operand.hbm [shape: f32[2,1,128], index: 2, kind: output, shape index: {}]
  %s3 = sld [smem:[#allocation0]]
  $region53: #{tpu_custom_call.1} parent=0
    _
  %s5 = ssub.s32 1, %s3
  %s6 = scalar_select 0, %s5, %s3
  $region1: #{tpu_custom_call.1} parent=0
    #allocation2 [shape = 'u8[8192]{0}', space=vmem, size = 0x2000, scoped, tag = 'input window, operand 0']
    #allocation3 [shape = 's32[2]{0}', space=sflag, size = 0x8, scoped, tag = 'scoped memory for tpu_custom_call.1']
    #allocation4 [shape = 's32[2]{0}', space=sflag, size = 0x8, scoped, tag = 'scoped memory for tpu_custom_call.1']
    #allocation5 [shape = 'u8[8192]{0}', space=vmem, size = 0x2000, scoped, tag = 'input window, operand 1']
    #allocation6 [shape = 's32[2]{0}', space=sflag, size = 0x8, scoped, tag = 'scoped memory for tpu_custom_call.1']
    #allocation7 [shape = 'u8[1024]{0}', space=vmem, size = 0x400, scoped, tag = 'output window, operand 0']
    %7 = vsyncpa [#allocation3], 0
    %s8 = scalar_lea.sflag [#allocation3], 1
    %9 = vsyncpa %s8, 0
    %10 = vsyncpa [#allocation6], 0
    %s11 = scalar_lea.sflag [#allocation6], 1
    %12 = vsyncpa %s11, 0
    %13 = vsyncpa [#allocation4], 0
    %s14 = scalar_lea.sflag [#allocation4], 1
    %15 = vsyncpa %s14, 0
    loop: start=0, step=1, limit=4
    $region2: #{tpu_custom_call.1} parent=1 // loop_pre_header
      _
    $region3: #{tpu_custom_call.1} parent=1 // loop_header
      %s17 = sphi 0, %s21
      %p18 = scmp.ge.s32.totalorder %s17, 4
      %s24 = sphi 0, %s36
      %s25 = sphi 0, %s32
      %s26 = sphi 0, %s24
      %s27 = sphi 0, %s25
      %s28 = sphi 0, %s26
      %s29 = sphi 0, %s27
      %s41 = sphi 0, %s43
      %s44 = sphi 0, %s41
      %s45 = sphi 0, %s44
      %s61 = sphi 0, %s45
      %s69 = sphi 0, %s71
      %s72 = sphi 0, %s69
      %s73 = sphi 0, %s72
      %s89 = sphi 0, %s73
      %s95 = sphi 0, %s97
      %s98 = sphi 0, %s95
      %s99 = sphi 0, %s98
      %s115 = sphi 0, %s99
    $region4: #{tpu_custom_call.1} parent=1 // loop_header_branch
      %20 = sbr.rel (%p18) target = $region8
    $region5: #{tpu_custom_call.1} parent=1 // loop_body
      %s22 = ssub.s32 %s17, 1
      %s23 = ssub.s32 %s17, 2
      %s30 = sadd.s32 1, %s25
      %p31 = scmp.ge.s32.totalorder %s30, 1
      %s32 = scalar_select %p31, 0, %s30
      %s33 = sadd.s32 1, %s24
      %s34 = scalar_select %p31, %s33, %s24
      %p35 = scmp.ge.s32.totalorder %s34, 2
      %s36 = scalar_select %p35, 0, %s34
      %s37 = sadd.s32 %s24, %s25
      %s38 = sadd.s32 %s36, %s32
      %s39 = ssub.s32 %s37, %s38
      %p40 = scmp.eq.s32.totalorder %s39, 0
      %s42 = sadd.s32 %s41, 1
      %s43 = scalar_select %p40, %s41, %s42
      %p46 = pneg %p40
      %p47 = scmp.eq.s32.totalorder %s17, 1
      %p48 = por %p46, %p47
      %p49 = scmp.ne.s32.totalorder %s41, %s44
      %p50 = scmp.eq.s32.totalorder %s17, 0
      %p51 = por %p49, %p50
      %p52 = scmp.ne.s32.totalorder %s41, %s44
      %p53 = scmp.eq.s32.totalorder %s22, 1
      %p54 = por %p52, %p53
      %p55 = scmp.ne.s32.totalorder %s44, %s45
      %p56 = scmp.eq.s32.totalorder %s22, 0
      %p57 = por %p55, %p56
      %p58 = scmp.ne.s32.totalorder %s44, %s45
      %p59 = scmp.eq.s32.totalorder %s23, 1
      %p60 = por %p58, %p59
      %p62 = scmp.ne.s32.totalorder %s45, %s61
      %p63 = scmp.eq.s32.totalorder %s23, 0
      %p64 = por %p62, %p63
      %s65 = sadd.s32 %s24, %s25
      %s66 = sadd.s32 %s36, %s32
      %s67 = ssub.s32 %s65, %s66
      %p68 = scmp.eq.s32.totalorder %s67, 0
      %s70 = sadd.s32 %s69, 1
      %s71 = scalar_select %p68, %s69, %s70
      %p74 = pneg %p68
      %p75 = scmp.eq.s32.totalorder %s17, 1
      %p76 = por %p74, %p75
      %p77 = scmp.ne.s32.totalorder %s69, %s72
      %p78 = scmp.eq.s32.totalorder %s17, 0
      %p79 = por %p77, %p78
      %p80 = scmp.ne.s32.totalorder %s69, %s72
      %p81 = scmp.eq.s32.totalorder %s22, 1
      %p82 = por %p80, %p81
      %p83 = scmp.ne.s32.totalorder %s72, %s73
      %p84 = scmp.eq.s32.totalorder %s22, 0
      %p85 = por %p83, %p84
      %p86 = scmp.ne.s32.totalorder %s72, %s73
      %p87 = scmp.eq.s32.totalorder %s23, 1
      %p88 = por %p86, %p87
      %p90 = scmp.ne.s32.totalorder %s73, %s89
      %p91 = scmp.eq.s32.totalorder %s23, 0
      %p92 = por %p90, %p91
      %s93 = ssub.s32 %s24, %s36
      %p94 = scmp.eq.s32.totalorder %s93, 0
      %s96 = sadd.s32 %s95, 1
      %s97 = scalar_select %p94, %s95, %s96
      %p100 = pneg %p94
      %p101 = scmp.eq.s32.totalorder %s17, 1
      %p102 = por %p100, %p101
      %p103 = scmp.ne.s32.totalorder %s95, %s98
      %p104 = scmp.eq.s32.totalorder %s17, 0
      %p105 = por %p103, %p104
      %p106 = scmp.ne.s32.totalorder %s95, %s98
      %p107 = scmp.eq.s32.totalorder %s22, 1
      %p108 = por %p106, %p107
      %p109 = scmp.ne.s32.totalorder %s98, %s99
      %p110 = scmp.eq.s32.totalorder %s22, 0
      %p111 = por %p109, %p110
      %p112 = scmp.ne.s32.totalorder %s98, %s99
      %p113 = scmp.eq.s32.totalorder %s23, 1
      %p114 = por %p112, %p113
      %p116 = scmp.ne.s32.totalorder %s99, %s115
      %p117 = scmp.eq.s32.totalorder %s23, 0
      %p118 = por %p116, %p117
      %p119 = scmp.le.s32.totalorder 1, %s17
      %p120 = scmp.lt.s32.totalorder %s17, 3
      %p121 = pnand %p119, %p120
      %p122 = pneg %p121
      // Predicated region
      $region9: #{tpu_custom_call.1} parent=5 // pred_check
        _
      $region10: #{tpu_custom_call.1} parent=5 // pred_check_branch
        %124 = sbr.rel (%p121) target = $region12
      $region11: #{tpu_custom_call.1} parent=5 // pred_region
        %s125 = ssub.s32 %s17, 1
      $region12: #{tpu_custom_call.1} parent=5 // pred_fallthru
        _
      %p126 = scmp.lt.s32.totalorder %s17, 2
      // Predicated region
      $region13: #{tpu_custom_call.1} parent=5 // pred_check
        %p127 = pneg %p126
      $region14: #{tpu_custom_call.1} parent=5 // pred_check_branch
        %129 = sbr.rel (%p127) target = $region16
      $region15: #{tpu_custom_call.1} parent=5 // pred_region
        // Predicated region
        $region17: #{tpu_custom_call.1} parent=15 // pred_check
          %p130 = pneg %p51
        $region18: #{tpu_custom_call.1} parent=15 // pred_check_branch
          %132 = sbr.rel (%p130) target = $region20
        $region19: #{tpu_custom_call.1} parent=15 // pred_region
          %s133 = sand.u32 %s41, 1
          %s134 = scalar_lea.sflag [#allocation3], %s133
          %s135 = sand.u32 %s41, 1
          %s136 = smul.addr %s135, 8
          %s137 = scalar_lea.vmem [#allocation2], %s136
          %s138 = sadd.s32 %s24, %s25
          %s140 = ssub.s32 128, 128
          %141 = vsyncadd %s134, %s140
          %s142 = smul.addr %s138, 128
          %s143 = scalar_lea.hbm %s0, %s142
          %s145 = sshll.u32 %s137, 4
          %s146 = int_to_ptr.vmem [resolvable:$true] %s145
          %148 = dma.hbm_to_vmem [thread:$0]  %s143, 128, %s146, %s134
        $region20: #{tpu_custom_call.1} parent=15 // pred_fallthru
          _
        // Predicated region
        $region21: #{tpu_custom_call.1} parent=15 // pred_check
          %p149 = pneg %p79
        $region22: #{tpu_custom_call.1} parent=15 // pred_check_branch
          %151 = sbr.rel (%p149) target = $region24
        $region23: #{tpu_custom_call.1} parent=15 // pred_region
          %s152 = sand.u32 %s69, 1
          %s153 = scalar_lea.sflag [#allocation6], %s152
          %s154 = sand.u32 %s69, 1
          %s155 = smul.addr %s154, 8
          %s156 = scalar_lea.vmem [#allocation5], %s155
          %s157 = sadd.s32 %s24, %s25
          %s159 = ssub.s32 128, 128
          %160 = vsyncadd %s153, %s159
          %s161 = smul.addr %s157, 128
          %s162 = scalar_lea.hbm %s1, %s161
          %s164 = sshll.u32 %s156, 4
          %s165 = int_to_ptr.vmem [resolvable:$true] %s164
          %167 = dma.hbm_to_vmem [thread:$0]  %s162, 128, %s165, %s153
        $region24: #{tpu_custom_call.1} parent=15 // pred_fallthru
          _
      $region16: #{tpu_custom_call.1} parent=5 // pred_fallthru
        _
      %p168 = scmp.le.s32.totalorder 1, %s17
      %p169 = scmp.lt.s32.totalorder %s17, 3
      %p170 = pnand %p168, %p169
      %p171 = pneg %p170
      // Predicated region
      $region25: #{tpu_custom_call.1} parent=5 // pred_check
        _
      $region26: #{tpu_custom_call.1} parent=5 // pred_check_branch
        %173 = sbr.rel (%p170) target = $region28
      $region27: #{tpu_custom_call.1} parent=5 // pred_region
        %s174 = ssub.s32 %s17, 1
        %s175 = sand.u32 %s44, 1
        %s176 = scalar_lea.sflag [#allocation3], %s175
        %s177 = sand.u32 %s44, 1
        %s178 = smul.addr %s177, 8
        %s179 = scalar_lea.vmem [#allocation2], %s178
        // Predicated region
        $region29: #{tpu_custom_call.1} parent=27 // pred_check
          %p180 = pneg %p57
        $region30: #{tpu_custom_call.1} parent=27 // pred_check_branch
          %182 = sbr.rel (%p180) target = $region32
        $region31: #{tpu_custom_call.1} parent=27 // pred_region
          %183 = dma.done %s176, 128
        $region32: #{tpu_custom_call.1} parent=27 // pred_fallthru
          _
        %s184 = sand.u32 %s72, 1
        %s185 = scalar_lea.sflag [#allocation6], %s184
        %s186 = sand.u32 %s72, 1
        %s187 = smul.addr %s186, 8
        %s188 = scalar_lea.vmem [#allocation5], %s187
        // Predicated region
        $region33: #{tpu_custom_call.1} parent=27 // pred_check
          %p189 = pneg %p85
        $region34: #{tpu_custom_call.1} parent=27 // pred_check_branch
          %191 = sbr.rel (%p189) target = $region36
        $region35: #{tpu_custom_call.1} parent=27 // pred_region
          %192 = dma.done %s185, 128
        $region36: #{tpu_custom_call.1} parent=27 // pred_fallthru
          _
        %s193 = sand.u32 %s44, 1
        %s194 = scalar_lea.sflag [#allocation3], %s193
        %s195 = sand.u32 %s44, 1
        %s196 = smul.addr %s195, 8
        %s197 = scalar_lea.vmem [#allocation2], %s196
        %p198 = pneg %p57
        %p199 = pneg %p54
        %s200 = sand.u32 %s72, 1
        %s201 = scalar_lea.sflag [#allocation6], %s200
        %s202 = sand.u32 %s72, 1
        %s203 = smul.addr %s202, 8
        %s204 = scalar_lea.vmem [#allocation5], %s203
        %p205 = pneg %p85
        %p206 = pneg %p82
        %p207 = pneg %p111
        %p208 = pneg %p108
        %s209 = sand.u32 %s98, 1
        %s210 = scalar_lea.sflag [#allocation4], %s209
        %s211 = sand.u32 %s98, 1
        %s212 = scalar_lea.vmem [#allocation7], %s211
        %s213 = sadd.s32 %s26, %s27
        %s214 = sadd.s32 %s26, %s27
        %p215 = scmp.eq.s32.totalorder %s27, 0
        // Predicated region
        $region37: #{tpu_custom_call.1} parent=27 // pred_check
          %p216 = pneg %p215
        $region38: #{tpu_custom_call.1} parent=27 // pred_check_branch
          %218 = sbr.rel (%p216) target = $region40
        $region39: #{tpu_custom_call.1} parent=27 // pred_region
          %219 = vst [vmem:[%s212] sm:$0x1] 0.0
        $region40: #{tpu_custom_call.1} parent=27 // pred_fallthru
          _
        %v220 = vld [vmem:[%s179] sm:$0xff]
        %v221 = vld [vmem:[%s188] sm:$0xff]
        %v222 = vsub.f32 %v220, %v221
        %v223 = vmul.f32 %v222, %v222
        %v224 = vmul.f32 %v221, -0.5
        %v225 = vadd.f32 %v224, 0.75
        %v226 = vmul.f32 %v223, %v225
        %v227 = vlog2.pop %v220
        %v228 = vmul.f32 %v227, 0.6931472
        %v229 = vmax.f32 %v228, -100.0
        %v230 = vsub.f32 1.0, %v220
        %v231 = vlog2.pop %v230
        %v232 = vmul.f32 %v231, 0.6931472
        %v233 = vmax.f32 %v232, -100.0
        %v234 = vsub.f32 %v229, %v233
        %v235 = vmul.f32 %v221, %v234
        %v236 = vadd.f32 %v233, %v235
        %v237 = vmul.f32 %v226, %v236
        %v238 = vld [vmem:[%s212] sm:$0x1]
        %v239 = vrot.slane %v237, 4
        %v240 = vadd.f32 %v237, %v239
        %v241 = vrot.slane %v240, 2
        %v242 = vadd.f32 %v240, %v241
        %v243 = vrot.slane %v242, 1
        %v244 = vadd.f32 %v242, %v243
        %v245 = vadd.f32 %v238, %v244
        %246 = vst [vmem:[%s212] sm:$0x1] %v245
        %s247 = sand.u32 %s98, 1
        %s248 = scalar_lea.sflag [#allocation4], %s247
        %s249 = sand.u32 %s98, 1
        %s250 = scalar_lea.vmem [#allocation7], %s249
        // Predicated region
        $region41: #{tpu_custom_call.1} parent=27 // pred_check
          %p251 = pneg %p108
        $region42: #{tpu_custom_call.1} parent=27 // pred_check_branch
          %253 = sbr.rel (%p251) target = $region44
        $region43: #{tpu_custom_call.1} parent=27 // pred_region
          %s255 = ssub.s32 16, 16
          %256 = vsyncadd %s248, %s255
          %s257 = smul.addr %s26, 16
          %s258 = scalar_lea.hbm %s2, %s257
          %s260 = sshll.u32 %s250, 4
          %s261 = int_to_ptr.vmem [resolvable:$true] %s260
          %263 = dma.vmem_to_hbm [thread:$0]  %s261, 16, %s258, %s248
        $region44: #{tpu_custom_call.1} parent=27 // pred_fallthru
          _
      $region28: #{tpu_custom_call.1} parent=5 // pred_fallthru
        _
      %p264 = scmp.le.s32.totalorder 2, %s17
      // Predicated region
      $region45: #{tpu_custom_call.1} parent=5 // pred_check
        %p265 = pneg %p264
      $region46: #{tpu_custom_call.1} parent=5 // pred_check_branch
        %267 = sbr.rel (%p265) target = $region48
      $region47: #{tpu_custom_call.1} parent=5 // pred_region
        %s268 = ssub.s32 %s17, 2
        // Predicated region
        $region49: #{tpu_custom_call.1} parent=47 // pred_check
          %p269 = pneg %p114
        $region50: #{tpu_custom_call.1} parent=47 // pred_check_branch
          %271 = sbr.rel (%p269) target = $region52
        $region51: #{tpu_custom_call.1} parent=47 // pred_region
          %s272 = sand.u32 %s99, 1
          %s273 = scalar_lea.sflag [#allocation4], %s272
          %s274 = sand.u32 %s99, 1
          %s275 = scalar_lea.vmem [#allocation7], %s274
          %276 = dma.done %s273, 16
        $region52: #{tpu_custom_call.1} parent=47 // pred_fallthru
          _
      $region48: #{tpu_custom_call.1} parent=5 // pred_fallthru
        _
    $region6: #{tpu_custom_call.1} parent=1 // loop_footer
      %s21 = sadd.s32 1, %s17
    $region7: #{tpu_custom_call.1} parent=1 // loop_footer_branch
      %16 = sbr.rel target = $region3
    $region8: #{tpu_custom_call.1} parent=1 // loop_exit
      _
    %277 = vsyncpa [#allocation3], 1
    %s278 = scalar_lea.sflag [#allocation3], 1
    %279 = vsyncpa %s278, 1
    %280 = vsyncpa [#allocation6], 1
    %s281 = scalar_lea.sflag [#allocation6], 1
    %282 = vsyncpa %s281, 1
    %283 = vsyncpa [#allocation4], 1
    %s284 = scalar_lea.sflag [#allocation4], 1
    %285 = vsyncpa %s284, 1

</llo_original>
